<compile_context>
chip_gen: v6e
topology: v6e:2x2x1
jax: 0.10.0
libtpu: 0.0.40
codegen_flags: <defaults>
</compile_context>

<pallas_src>
import functools

import jax
import jax.numpy as jnp
from jax.experimental import pallas as pl
from jax.experimental.pallas import tpu as pltpu

D_IN, H_DIM, D_OUT = 756, 250, 315


def _round_up(n, m):
    return ((n + m - 1) // m) * m


D_IN_P = _round_up(D_IN, 128)    # 756 -> 768
H_P = _round_up(H_DIM, 128)      # 250 -> 256
D_OUT_P = _round_up(D_OUT, 128)  # 315 -> 384


def mlp_kernel(x_ref, w1_ref, b1_ref, w2_ref, b2_ref, out_ref):
    # fc1: (tb, 768)bf16 @ (768, 256)bf16 -> f32 accum (MXU)
    h = jnp.dot(x_ref[...], w1_ref[...], preferred_element_type=jnp.float32)
    h = jax.nn.sigmoid(h + b1_ref[...])          # bias + sigmoid in f32 (VPU/EUP)
    # fc2: (tb, 256)bf16 @ (256, 384)bf16 -> f32 accum (MXU)
    y = jnp.dot(h.astype(jnp.bfloat16), w2_ref[...],
                preferred_element_type=jnp.float32)
    out_ref[...] = (y + b2_ref[...]).astype(out_ref.dtype)


def prepare_params(w1_t, b1, w2_t, b2):
    """Pad to lane-friendly shapes and cast weights to bf16 ONCE (init-time).

    w1_t: (756, 250), b1: (250,), w2_t: (250, 315), b2: (315,).
    Padded rows of w2p must remain exactly zero (sigmoid(0)=0.5 in padded
    hidden lanes then contributes nothing)."""
    f32, bf16 = jnp.float32, jnp.bfloat16
    w1p = jnp.zeros((D_IN_P, H_P), f32).at[:D_IN, :H_DIM].set(w1_t).astype(bf16)
    b1p = jnp.zeros((1, H_P), f32).at[:, :H_DIM].set(jnp.reshape(b1, (1, -1)))
    w2p = jnp.zeros((H_P, D_OUT_P), f32).at[:H_DIM, :D_OUT].set(w2_t).astype(bf16)
    b2p = jnp.zeros((1, D_OUT_P), f32).at[:, :D_OUT].set(jnp.reshape(b2, (1, -1)))
    return w1p, b1p, w2p, b2p


def nn_forward(x, w1p, b1p, w2p, b2p, *, tile_b=512):
    """x: (B, 756) f32; prepared padded params. Returns (B, 315) f32."""
    B, d_in = x.shape
    assert d_in == D_IN

    if B <= tile_b:
        tb = max(_round_up(B, 16), 16)   # bf16 packs 16 rows per vreg
        Bp = tb
    else:
        tb = tile_b
        Bp = _round_up(B, tb)

    # Single-pass bf16 pad of x (no intermediate padded f32 copy).
    xp = jnp.pad(x.astype(jnp.bfloat16), ((0, Bp - B), (0, D_IN_P - d_in)))

    grid = (Bp // tb,)

    # Advisory cost estimate so XLA can overlap the pad/slice around the call.
    flops = 2 * Bp * (D_IN_P * H_P + H_P * D_OUT_P)
    bytes_accessed = (Bp * D_IN_P * 2                       # x (bf16)
                      + D_IN_P * H_P * 2 + H_P * D_OUT_P * 2  # weights (bf16)
                      + (H_P + D_OUT_P) * 4                  # biases (f32)
                      + Bp * D_OUT_P * 4)                    # out (f32)
    cost = pl.CostEstimate(flops=flops, transcendentals=Bp * H_P,
                           bytes_accessed=bytes_accessed)

    # Explicit scoped-VMEM limit: double-buffered x/out tiles + resident
    # weights, with 2x headroom (v5e default scoped limit is only 16 MiB).
    tile_bytes = 2 * (tb * D_IN_P * 2 + tb * D_OUT_P * 4)
    weight_bytes = 2 * (D_IN_P * H_P * 2 + H_P * D_OUT_P * 2
                        + (H_P + D_OUT_P) * 4)
    vmem_limit = int(min(max(2 * (tile_bytes + weight_bytes), 16 << 20),
                         64 << 20))

    out = pl.pallas_call(
        mlp_kernel,
        out_shape=jax.ShapeDtypeStruct((Bp, D_OUT_P), jnp.float32),
        grid=grid,
        in_specs=[
            pl.BlockSpec((tb, D_IN_P), lambda i: (i, 0)),       # x: batch-tiled
            pl.BlockSpec((D_IN_P, H_P), lambda i: (0, 0)),      # w1: VMEM-resident
            pl.BlockSpec((1, H_P), lambda i: (0, 0)),           # b1
            pl.BlockSpec((H_P, D_OUT_P), lambda i: (0, 0)),     # w2: VMEM-resident
            pl.BlockSpec((1, D_OUT_P), lambda i: (0, 0)),       # b2
        ],
        out_specs=pl.BlockSpec((tb, D_OUT_P), lambda i: (i, 0)),
        compiler_params=pltpu.CompilerParams(
            dimension_semantics=("parallel",),
            vmem_limit_bytes=vmem_limit),
        cost_estimate=cost,
    )(xp, w1p, b1p, w2p, b2p)

    return out[:B, :D_OUT]


def reference(x, w1_t, b1, w2_t, b2):
    # Mirrors the kernel's intentional bf16 weight/activation quantization so
    # the allclose check is tight; accumulation is f32 in both paths.
    xb = x.astype(jnp.bfloat16).astype(jnp.float32)
    w1b = w1_t.astype(jnp.bfloat16).astype(jnp.float32)
    w2b = w2_t.astype(jnp.bfloat16).astype(jnp.float32)
    h = jax.nn.sigmoid(xb @ w1b + jnp.reshape(b1, (1, -1)))
    hb = h.astype(jnp.bfloat16).astype(jnp.float32)
    return hb @ w2b + jnp.reshape(b2, (1, -1))


if __name__ == "__main__":
    key = jax.random.PRNGKey(0)
    k_x, k_w1, k_b1, k_w2, k_b2 = jax.random.split(key, 5)

    # Deterministic synthetic parameters (PyTorch-like uniform init scale).
    s1 = 1.0 / jnp.sqrt(D_IN)
    s2 = 1.0 / jnp.sqrt(H_DIM)
    w1_t = jax.random.uniform(k_w1, (D_IN, H_DIM), jnp.float32, -s1, s1)
    b1 = jax.random.uniform(k_b1, (H_DIM,), jnp.float32, -s1, s1)
    w2_t = jax.random.uniform(k_w2, (H_DIM, D_OUT), jnp.float32, -s2, s2)
    b2 = jax.random.uniform(k_b2, (D_OUT,), jnp.float32, -s2, s2)

    # Pad / cast weights ONCE.
    params = prepare_params(w1_t, b1, w2_t, b2)

    fwd = jax.jit(functools.partial(nn_forward, tile_b=512))

    # Small batch (single-tile path).
    B = 8
    x = jax.random.normal(k_x, (B, D_IN), dtype=jnp.float32)
    out = jax.block_until_ready(fwd(x, *params))
    ref = reference(x, w1_t, b1, w2_t, b2)
    assert out.shape == (B, D_OUT)
    assert jnp.allclose(out, ref, atol=2e-3, rtol=2e-3), (
        float(jnp.max(jnp.abs(out - ref))))

    # Larger batch (multi-step grid path, exercises batch padding + tiling).
    B2 = 600
    x2 = jax.random.normal(k_x, (B2, D_IN), dtype=jnp.float32)
    out2 = jax.block_until_ready(fwd(x2, *params))
    ref2 = reference(x2, w1_t, b1, w2_t, b2)
    assert out2.shape == (B2, D_OUT)
    assert jnp.allclose(out2, ref2, atol=2e-3, rtol=2e-3), (
        float(jnp.max(jnp.abs(out2 - ref2))))

    print("KERNEL_OK")
</pallas_src>

<mosaic_0001>
module attributes {stable_mosaic.version = 11 : i64} {
  func.func @mlp_kernel(%arg0: i32, %arg1: memref<16x768xbf16, #tpu.memory_space<vmem>>, %arg2: memref<768x256xbf16, #tpu.memory_space<vmem>>, %arg3: memref<1x256xf32, #tpu.memory_space<vmem>>, %arg4: memref<256x384xbf16, #tpu.memory_space<vmem>>, %arg5: memref<1x384xf32, #tpu.memory_space<vmem>>, %arg6: memref<16x384xf32, #tpu.memory_space<vmem>>) attributes {dimension_semantics = [#tpu.dimension_semantics<parallel>], iteration_bounds = array<i64: 1>, scalar_prefetch = 0 : i64, scratch_operands = 0 : i64, tpu.core_type = #tpu.core_type<tc>, window_params = [{transform_indices = @transform_0, window_bounds = array<i64: 16, 768>}, {pipeline_mode = #tpu.pipeline_mode<synchronous>, transform_indices = @transform_1, window_bounds = array<i64: 768, 256>}, {pipeline_mode = #tpu.pipeline_mode<synchronous>, transform_indices = @transform_2, window_bounds = array<i64: 1, 256>}, {pipeline_mode = #tpu.pipeline_mode<synchronous>, transform_indices = @transform_3, window_bounds = array<i64: 256, 384>}, {pipeline_mode = #tpu.pipeline_mode<synchronous>, transform_indices = @transform_4, window_bounds = array<i64: 1, 384>}, {transform_indices = @transform_5, window_bounds = array<i64: 16, 384>}]} {
    %c0 = arith.constant 0 : index
    %c0_0 = arith.constant 0 : index
    %0 = vector.load %arg1[%c0, %c0_0] : memref<16x768xbf16, #tpu.memory_space<vmem>>, vector<16x768xbf16>
    %c0_1 = arith.constant 0 : index
    %c0_2 = arith.constant 0 : index
    %1 = vector.load %arg2[%c0_1, %c0_2] : memref<768x256xbf16, #tpu.memory_space<vmem>>, vector<768x256xbf16>
    %cst = arith.constant dense<0.000000e+00> : vector<16x256xf32>
    %2 = tpu.matmul %0, %1, %cst {dimension_numbers = #tpu.dot_dimension_numbers<[1], [0], [0], [1], [0, 0, 1, 1], [], []>} : vector<16x768xbf16>, vector<768x256xbf16>, vector<16x256xf32> -> vector<16x256xf32>
    %c0_3 = arith.constant 0 : index
    %c0_4 = arith.constant 0 : index
    %3 = vector.load %arg3[%c0_3, %c0_4] : memref<1x256xf32, #tpu.memory_space<vmem>>, vector<1x256xf32>
    %4 = vector.broadcast %3 : vector<1x256xf32> to vector<16x256xf32>
    %5 = arith.addf %2, %4 : vector<16x256xf32>
    %6 = arith.negf %5 : vector<16x256xf32>
    %7 = math.exp %6 : vector<16x256xf32>
    %cst_5 = arith.constant 1.000000e+00 : f32
    %8 = vector.broadcast %cst_5 : f32 to vector<16x256xf32>
    %9 = arith.addf %8, %7 : vector<16x256xf32>
    %10 = arith.divf %8, %9 : vector<16x256xf32>
    %11 = arith.truncf %10 : vector<16x256xf32> to vector<16x256xbf16>
    %c0_6 = arith.constant 0 : index
    %c0_7 = arith.constant 0 : index
    %12 = vector.load %arg4[%c0_6, %c0_7] : memref<256x384xbf16, #tpu.memory_space<vmem>>, vector<256x384xbf16>
    %cst_8 = arith.constant dense<0.000000e+00> : vector<16x384xf32>
    %13 = tpu.matmul %11, %12, %cst_8 {dimension_numbers = #tpu.dot_dimension_numbers<[1], [0], [0], [1], [0, 0, 1, 1], [], []>} : vector<16x256xbf16>, vector<256x384xbf16>, vector<16x384xf32> -> vector<16x384xf32>
    %c0_9 = arith.constant 0 : index
    %c0_10 = arith.constant 0 : index
    %14 = vector.load %arg5[%c0_9, %c0_10] : memref<1x384xf32, #tpu.memory_space<vmem>>, vector<1x384xf32>
    %15 = vector.broadcast %14 : vector<1x384xf32> to vector<16x384xf32>
    %16 = arith.addf %13, %15 : vector<16x384xf32>
    %c0_11 = arith.constant 0 : index
    %c0_12 = arith.constant 0 : index
    %17 = vector.load %arg6[%c0_11, %c0_12] : memref<16x384xf32, #tpu.memory_space<vmem>>, vector<16x384xf32>
    tpu.vector_store %arg6[%c0_11, %c0_12], %16 {strides = array<i32>} : memref<16x384xf32, #tpu.memory_space<vmem>>, vector<16x384xf32>,
    return
  }
  func.func @transform_0(%arg0: i32) -> (i32, i32) {
    %c0_i32 = arith.constant 0 : i32
    %c0_i32_0 = arith.constant 0 : i32
    return %arg0, %c0_i32 : i32, i32
  }
  func.func @transform_1(%arg0: i32) -> (i32, i32) {
    %c0_i32 = arith.constant 0 : i32
    %c0_i32_0 = arith.constant 0 : i32
    %c0_i32_1 = arith.constant 0 : i32
    return %c0_i32, %c0_i32_0 : i32, i32
  }
  func.func @transform_2(%arg0: i32) -> (i32, i32) {
    %c0_i32 = arith.constant 0 : i32
    %c0_i32_0 = arith.constant 0 : i32
    %c0_i32_1 = arith.constant 0 : i32
    return %c0_i32, %c0_i32_0 : i32, i32
  }
  func.func @transform_3(%arg0: i32) -> (i32, i32) {
    %c0_i32 = arith.constant 0 : i32
    %c0_i32_0 = arith.constant 0 : i32
    %c0_i32_1 = arith.constant 0 : i32
    return %c0_i32, %c0_i32_0 : i32, i32
  }
  func.func @transform_4(%arg0: i32) -> (i32, i32) {
    %c0_i32 = arith.constant 0 : i32
    %c0_i32_0 = arith.constant 0 : i32
    %c0_i32_1 = arith.constant 0 : i32
    return %c0_i32, %c0_i32_0 : i32, i32
  }
  func.func @transform_5(%arg0: i32) -> (i32, i32) {
    %c0_i32 = arith.constant 0 : i32
    %c0_i32_0 = arith.constant 0 : i32
    return %arg0, %c0_i32 : i32, i32
  }
}

</mosaic_0001>

<llo_original>
// kernel: nn_forward.1
$region0: #{nn_forward.1}
  #allocation0 [shape = 'u32[]', space=smem, size = 0x4, offset = 0x4, fixed_abs, tag = 'smem constant byte address 0x4 - core index']
  #allocation1 [shape = 'u32[144,128]{1,0:T(1,128)}', space=vmem, size = 0x12000, scoped, tag = 'internal scratch']
  %s0 = inlined_call_operand.vmem [shape: bf16[16,768], index: 0, kind: input, shape index: {}]
  %s1 = inlined_call_operand.hbm [shape: bf16[768,256], index: 1, kind: input, shape index: {}]
  %s2 = inlined_call_operand.vmem [shape: f32[1,256], index: 2, kind: input, shape index: {}]
  %s3 = inlined_call_operand.hbm [shape: bf16[256,384], index: 3, kind: input, shape index: {}]
  %s4 = inlined_call_operand.vmem [shape: f32[1,384], index: 4, kind: input, shape index: {}]
  %s5 = inlined_call_operand.vmem [shape: f32[16,384], index: 5, kind: output, shape index: {}]
  %s6 = sld [smem:[#allocation0]]
  $region38: #{nn_forward.1} parent=0
    _
  %s8 = ssub.s32 1, %s6
  %s9 = scalar_select 0, %s8, %s6
  $region1: #{nn_forward.1} parent=0
    #allocation2 [shape = 'u8[393216]{0}', space=vmem, size = 0x60000, scoped, tag = 'input window, operand 1, single buffered']
    #allocation3 [shape = 's32[1]{0}', space=sflag, size = 0x4, scoped, tag = 'scoped memory for nn_forward.1']
    #allocation4 [shape = 'u8[196608]{0}', space=vmem, size = 0x30000, scoped, tag = 'input window, operand 3, single buffered']
    #allocation5 [shape = 's32[1]{0}', space=sflag, size = 0x4, scoped, tag = 'scoped memory for nn_forward.1']
    %10 = vsyncpa [#allocation3], 0
    %11 = vsyncpa [#allocation5], 0
    // Predicated region
    $region2: #{nn_forward.1} parent=1 // pred_check
      _
    $region3: #{nn_forward.1} parent=1 // pred_check_branch
      %13 = sbr.rel (0) target = $region5
    $region4: #{nn_forward.1} parent=1 // pred_region
      _
    $region5: #{nn_forward.1} parent=1 // pred_fallthru
      _
    // Predicated region
    $region6: #{nn_forward.1} parent=1 // pred_check
      _
    $region7: #{nn_forward.1} parent=1 // pred_check_branch
      %15 = sbr.rel (0) target = $region9
    $region8: #{nn_forward.1} parent=1 // pred_region
      %s17 = ssub.s32 12288, 12288
      %18 = vsyncadd [#allocation3], %s17
      %s19 = sshll.u32 [#allocation2], 4
      %s20 = int_to_ptr.vmem [resolvable:$true] %s19
      %25 = dma.hbm_to_vmem [thread:$0]  %s1, 12288, %s20, [#allocation3], 128, 128, 8
    $region9: #{nn_forward.1} parent=1 // pred_fallthru
      _
    // Predicated region
    $region10: #{nn_forward.1} parent=1 // pred_check
      _
    $region11: #{nn_forward.1} parent=1 // pred_check_branch
      %27 = sbr.rel (0) target = $region13
    $region12: #{nn_forward.1} parent=1 // pred_region
      _
    $region13: #{nn_forward.1} parent=1 // pred_fallthru
      _
    // Predicated region
    $region14: #{nn_forward.1} parent=1 // pred_check
      _
    $region15: #{nn_forward.1} parent=1 // pred_check_branch
      %29 = sbr.rel (0) target = $region17
    $region16: #{nn_forward.1} parent=1 // pred_region
      %s31 = ssub.s32 6144, 6144
      %32 = vsyncadd [#allocation5], %s31
      %s33 = sshll.u32 [#allocation4], 4
      %s34 = int_to_ptr.vmem [resolvable:$true] %s33
      %39 = dma.hbm_to_vmem [thread:$0]  %s3, 6144, %s34, [#allocation5], 192, 192, 12
    $region17: #{nn_forward.1} parent=1 // pred_fallthru
      _
    // Predicated region
    $region18: #{nn_forward.1} parent=1 // pred_check
      _
    $region19: #{nn_forward.1} parent=1 // pred_check_branch
      %41 = sbr.rel (0) target = $region21
    $region20: #{nn_forward.1} parent=1 // pred_region
      _
    $region21: #{nn_forward.1} parent=1 // pred_fallthru
      _
    // Predicated region
    $region22: #{nn_forward.1} parent=1 // pred_check
      _
    $region23: #{nn_forward.1} parent=1 // pred_check_branch
      %43 = sbr.rel (0) target = $region25
    $region24: #{nn_forward.1} parent=1 // pred_region
      %44 = dma.done [#allocation3], 12288
    $region25: #{nn_forward.1} parent=1 // pred_fallthru
      _
    // Predicated region
    $region26: #{nn_forward.1} parent=1 // pred_check
      _
    $region27: #{nn_forward.1} parent=1 // pred_check_branch
      %46 = sbr.rel (0) target = $region29
    $region28: #{nn_forward.1} parent=1 // pred_region
      %47 = dma.done [#allocation5], 6144
    $region29: #{nn_forward.1} parent=1 // pred_fallthru
      _
    %v49 = vld [vmem:[%s0] sm:$0xff]
    %v50 = vld [vmem:[%s0 + $0x8] sm:$0xff]
    %v51 = vld [vmem:[%s0 + $0x10] sm:$0xff]
    %v52 = vld [vmem:[%s0 + $0x18] sm:$0xff]
    %v53 = vld [vmem:[%s0 + $0x20] sm:$0xff]
    %v54 = vld [vmem:[%s0 + $0x28] sm:$0xff]
    %v55 = vld [vmem:[#allocation2] sm:$0xff]
    %v56 = vld [vmem:[#allocation2 + $0x8] sm:$0xff]
    %v57 = vld [vmem:[#allocation2 + $0x10] sm:$0xff]
    %v58 = vld [vmem:[#allocation2 + $0x18] sm:$0xff]
    %v59 = vld [vmem:[#allocation2 + $0x20] sm:$0xff]
    %v60 = vld [vmem:[#allocation2 + $0x28] sm:$0xff]
    %v61 = vld [vmem:[#allocation2 + $0x30] sm:$0xff]
    %v62 = vld [vmem:[#allocation2 + $0x38] sm:$0xff]
    %v63 = vld [vmem:[#allocation2 + $0x40] sm:$0xff]
    %v64 = vld [vmem:[#allocation2 + $0x48] sm:$0xff]
    %v65 = vld [vmem:[#allocation2 + $0x50] sm:$0xff]
    %v66 = vld [vmem:[#allocation2 + $0x58] sm:$0xff]
    %v67 = vld [vmem:[#allocation2 + $0x60] sm:$0xff]
    %v68 = vld [vmem:[#allocation2 + $0x68] sm:$0xff]
    %v69 = vld [vmem:[#allocation2 + $0x70] sm:$0xff]
    %v70 = vld [vmem:[#allocation2 + $0x78] sm:$0xff]
    %v71 = vld [vmem:[#allocation2 + $0x80] sm:$0xff]
    %v72 = vld [vmem:[#allocation2 + $0x88] sm:$0xff]
    %v73 = vld [vmem:[#allocation2 + $0x90] sm:$0xff]
    %v74 = vld [vmem:[#allocation2 + $0x98] sm:$0xff]
    %v75 = vld [vmem:[#allocation2 + $0xa0] sm:$0xff]
    %v76 = vld [vmem:[#allocation2 + $0xa8] sm:$0xff]
    %v77 = vld [vmem:[#allocation2 + $0xb0] sm:$0xff]
    %v78 = vld [vmem:[#allocation2 + $0xb8] sm:$0xff]
    %v79 = vld [vmem:[#allocation2 + $0xc0] sm:$0xff]
    %v80 = vld [vmem:[#allocation2 + $0xc8] sm:$0xff]
    %v81 = vld [vmem:[#allocation2 + $0xd0] sm:$0xff]
    %v82 = vld [vmem:[#allocation2 + $0xd8] sm:$0xff]
    %v83 = vld [vmem:[#allocation2 + $0xe0] sm:$0xff]
    %v84 = vld [vmem:[#allocation2 + $0xe8] sm:$0xff]
    %v85 = vld [vmem:[#allocation2 + $0xf0] sm:$0xff]
    %v86 = vld [vmem:[#allocation2 + $0xf8] sm:$0xff]
    %v87 = vld [vmem:[#allocation2 + $0x100] sm:$0xff]
    %v88 = vld [vmem:[#allocation2 + $0x108] sm:$0xff]
    %v89 = vld [vmem:[#allocation2 + $0x110] sm:$0xff]
    %v90 = vld [vmem:[#allocation2 + $0x118] sm:$0xff]
    %v91 = vld [vmem:[#allocation2 + $0x120] sm:$0xff]
    %v92 = vld [vmem:[#allocation2 + $0x128] sm:$0xff]
    %v93 = vld [vmem:[#allocation2 + $0x130] sm:$0xff]
    %v94 = vld [vmem:[#allocation2 + $0x138] sm:$0xff]
    %v95 = vld [vmem:[#allocation2 + $0x140] sm:$0xff]
    %v96 = vld [vmem:[#allocation2 + $0x148] sm:$0xff]
    %v97 = vld [vmem:[#allocation2 + $0x150] sm:$0xff]
    %v98 = vld [vmem:[#allocation2 + $0x158] sm:$0xff]
    %v99 = vld [vmem:[#allocation2 + $0x160] sm:$0xff]
    %v100 = vld [vmem:[#allocation2 + $0x168] sm:$0xff]
    %v101 = vld [vmem:[#allocation2 + $0x170] sm:$0xff]
    %v102 = vld [vmem:[#allocation2 + $0x178] sm:$0xff]
    %v103 = vld [vmem:[#allocation2 + $0x180] sm:$0xff]
    %v104 = vld [vmem:[#allocation2 + $0x188] sm:$0xff]
    %v105 = vld [vmem:[#allocation2 + $0x190] sm:$0xff]
    %v106 = vld [vmem:[#allocation2 + $0x198] sm:$0xff]
    %v107 = vld [vmem:[#allocation2 + $0x1a0] sm:$0xff]
    %v108 = vld [vmem:[#allocation2 + $0x1a8] sm:$0xff]
    %v109 = vld [vmem:[#allocation2 + $0x1b0] sm:$0xff]
    %v110 = vld [vmem:[#allocation2 + $0x1b8] sm:$0xff]
    %v111 = vld [vmem:[#allocation2 + $0x1c0] sm:$0xff]
    %v112 = vld [vmem:[#allocation2 + $0x1c8] sm:$0xff]
    %v113 = vld [vmem:[#allocation2 + $0x1d0] sm:$0xff]
    %v114 = vld [vmem:[#allocation2 + $0x1d8] sm:$0xff]
    %v115 = vld [vmem:[#allocation2 + $0x1e0] sm:$0xff]
    %v116 = vld [vmem:[#allocation2 + $0x1e8] sm:$0xff]
    %v117 = vld [vmem:[#allocation2 + $0x1f0] sm:$0xff]
    %v118 = vld [vmem:[#allocation2 + $0x1f8] sm:$0xff]
    %v119 = vld [vmem:[#allocation2 + $0x200] sm:$0xff]
    %v120 = vld [vmem:[#allocation2 + $0x208] sm:$0xff]
    %v121 = vld [vmem:[#allocation2 + $0x210] sm:$0xff]
    %v122 = vld [vmem:[#allocation2 + $0x218] sm:$0xff]
    %v123 = vld [vmem:[#allocation2 + $0x220] sm:$0xff]
    %v124 = vld [vmem:[#allocation2 + $0x228] sm:$0xff]
    %v125 = vld [vmem:[#allocation2 + $0x230] sm:$0xff]
    %v126 = vld [vmem:[#allocation2 + $0x238] sm:$0xff]
    %v127 = vld [vmem:[#allocation2 + $0x240] sm:$0xff]
    %v128 = vld [vmem:[#allocation2 + $0x248] sm:$0xff]
    %v129 = vld [vmem:[#allocation2 + $0x250] sm:$0xff]
    %v130 = vld [vmem:[#allocation2 + $0x258] sm:$0xff]
    %v131 = vld [vmem:[#allocation2 + $0x260] sm:$0xff]
    %v132 = vld [vmem:[#allocation2 + $0x268] sm:$0xff]
    %v133 = vld [vmem:[#allocation2 + $0x270] sm:$0xff]
    %v134 = vld [vmem:[#allocation2 + $0x278] sm:$0xff]
    %v135 = vld [vmem:[#allocation2 + $0x280] sm:$0xff]
    %v136 = vld [vmem:[#allocation2 + $0x288] sm:$0xff]
    %v137 = vld [vmem:[#allocation2 + $0x290] sm:$0xff]
    %v138 = vld [vmem:[#allocation2 + $0x298] sm:$0xff]
    %v139 = vld [vmem:[#allocation2 + $0x2a0] sm:$0xff]
    %v140 = vld [vmem:[#allocation2 + $0x2a8] sm:$0xff]
    %v141 = vld [vmem:[#allocation2 + $0x2b0] sm:$0xff]
    %v142 = vld [vmem:[#allocation2 + $0x2b8] sm:$0xff]
    %v143 = vld [vmem:[#allocation2 + $0x2c0] sm:$0xff]
    %v144 = vld [vmem:[#allocation2 + $0x2c8] sm:$0xff]
    %v145 = vld [vmem:[#allocation2 + $0x2d0] sm:$0xff]
    %v146 = vld [vmem:[#allocation2 + $0x2d8] sm:$0xff]
    %v147 = vld [vmem:[#allocation2 + $0x2e0] sm:$0xff]
    %v148 = vld [vmem:[#allocation2 + $0x2e8] sm:$0xff]
    %v149 = vld [vmem:[#allocation2 + $0x2f0] sm:$0xff]
    %v150 = vld [vmem:[#allocation2 + $0x2f8] sm:$0xff]
    %v151 = vld [vmem:[%s2] sm:$0x3]
    %v153 = vlaneseq
    %v154 = vshrl.u32 %v153, 7
    %v155 = vsub.s32 0, %v154
    %v156 = vrot.slane %v151, %v155
    %v157 = vlaneseq
    %v158 = vshrl.u32 %v157, 7
    %v159 = vsub.s32 1, %v158
    %v160 = vrot.slane %v151, %v159
    %v169 = vunpack.c.l.b16 %v49
    %v170 = vunpack.c.h.b16 %v49
    %v171 = vunpack.c.l.b16 %v50
    %v172 = vunpack.c.h.b16 %v50
    %v173 = vunpack.c.l.b16 %v51
    %v174 = vunpack.c.h.b16 %v51
    %v175 = vunpack.c.l.b16 %v52
    %v176 = vunpack.c.h.b16 %v52
    %v177 = vunpack.c.l.b16 %v53
    %v178 = vunpack.c.h.b16 %v53
    %v179 = vunpack.c.l.b16 %v54
    %v180 = vunpack.c.h.b16 %v54
    %v181 = vpack.c.b16 %v175, %v169
    %v182 = vpack.c.b16 %v176, %v170
    %v183 = vpack.c.b16 %v177, %v171
    %v184 = vpack.c.b16 %v178, %v172
    %v185 = vpack.c.b16 %v179, %v173
    %v186 = vpack.c.b16 %v180, %v174
    %v289 = vunpack.c.l.b16 %v55
    %v290 = vunpack.c.h.b16 %v55
    %v291 = vunpack.c.l.b16 %v56
    %v292 = vunpack.c.h.b16 %v56
    %v293 = vunpack.c.l.b16 %v57
    %v294 = vunpack.c.h.b16 %v57
    %v295 = vunpack.c.l.b16 %v58
    %v296 = vunpack.c.h.b16 %v58
    %v297 = vunpack.c.l.b16 %v59
    %v298 = vunpack.c.h.b16 %v59
    %v299 = vunpack.c.l.b16 %v60
    %v300 = vunpack.c.h.b16 %v60
    %v301 = vunpack.c.l.b16 %v61
    %v302 = vunpack.c.h.b16 %v61
    %v303 = vunpack.c.l.b16 %v62
    %v304 = vunpack.c.h.b16 %v62
    %v305 = vunpack.c.l.b16 %v63
    %v306 = vunpack.c.h.b16 %v63
    %v307 = vunpack.c.l.b16 %v64
    %v308 = vunpack.c.h.b16 %v64
    %v309 = vunpack.c.l.b16 %v65
    %v310 = vunpack.c.h.b16 %v65
    %v311 = vunpack.c.l.b16 %v66
    %v312 = vunpack.c.h.b16 %v66
    %v313 = vunpack.c.l.b16 %v67
    %v314 = vunpack.c.h.b16 %v67
    %v315 = vunpack.c.l.b16 %v68
    %v316 = vunpack.c.h.b16 %v68
    %v317 = vunpack.c.l.b16 %v69
    %v318 = vunpack.c.h.b16 %v69
    %v319 = vunpack.c.l.b16 %v70
    %v320 = vunpack.c.h.b16 %v70
    %v321 = vunpack.c.l.b16 %v71
    %v322 = vunpack.c.h.b16 %v71
    %v323 = vunpack.c.l.b16 %v72
    %v324 = vunpack.c.h.b16 %v72
    %v325 = vunpack.c.l.b16 %v73
    %v326 = vunpack.c.h.b16 %v73
    %v327 = vunpack.c.l.b16 %v74
    %v328 = vunpack.c.h.b16 %v74
    %v329 = vunpack.c.l.b16 %v75
    %v330 = vunpack.c.h.b16 %v75
    %v331 = vunpack.c.l.b16 %v76
    %v332 = vunpack.c.h.b16 %v76
    %v333 = vunpack.c.l.b16 %v77
    %v334 = vunpack.c.h.b16 %v77
    %v335 = vunpack.c.l.b16 %v78
    %v336 = vunpack.c.h.b16 %v78
    %v337 = vunpack.c.l.b16 %v79
    %v338 = vunpack.c.h.b16 %v79
    %v339 = vunpack.c.l.b16 %v80
    %v340 = vunpack.c.h.b16 %v80
    %v341 = vunpack.c.l.b16 %v81
    %v342 = vunpack.c.h.b16 %v81
    %v343 = vunpack.c.l.b16 %v82
    %v344 = vunpack.c.h.b16 %v82
    %v345 = vunpack.c.l.b16 %v83
    %v346 = vunpack.c.h.b16 %v83
    %v347 = vunpack.c.l.b16 %v84
    %v348 = vunpack.c.h.b16 %v84
    %v349 = vunpack.c.l.b16 %v85
    %v350 = vunpack.c.h.b16 %v85
    %v351 = vunpack.c.l.b16 %v86
    %v352 = vunpack.c.h.b16 %v86
    %v353 = vunpack.c.l.b16 %v87
    %v354 = vunpack.c.h.b16 %v87
    %v355 = vunpack.c.l.b16 %v88
    %v356 = vunpack.c.h.b16 %v88
    %v357 = vunpack.c.l.b16 %v89
    %v358 = vunpack.c.h.b16 %v89
    %v359 = vunpack.c.l.b16 %v90
    %v360 = vunpack.c.h.b16 %v90
    %v361 = vunpack.c.l.b16 %v91
    %v362 = vunpack.c.h.b16 %v91
    %v363 = vunpack.c.l.b16 %v92
    %v364 = vunpack.c.h.b16 %v92
    %v365 = vunpack.c.l.b16 %v93
    %v366 = vunpack.c.h.b16 %v93
    %v367 = vunpack.c.l.b16 %v94
    %v368 = vunpack.c.h.b16 %v94
    %v369 = vunpack.c.l.b16 %v95
    %v370 = vunpack.c.h.b16 %v95
    %v371 = vunpack.c.l.b16 %v96
    %v372 = vunpack.c.h.b16 %v96
    %v373 = vunpack.c.l.b16 %v97
    %v374 = vunpack.c.h.b16 %v97
    %v375 = vunpack.c.l.b16 %v98
    %v376 = vunpack.c.h.b16 %v98
    %v377 = vunpack.c.l.b16 %v99
    %v378 = vunpack.c.h.b16 %v99
    %v379 = vunpack.c.l.b16 %v100
    %v380 = vunpack.c.h.b16 %v100
    %v381 = vunpack.c.l.b16 %v101
    %v382 = vunpack.c.h.b16 %v101
    %v383 = vunpack.c.l.b16 %v102
    %v384 = vunpack.c.h.b16 %v102
    %v385 = vunpack.c.l.b16 %v103
    %v386 = vunpack.c.h.b16 %v103
    %v387 = vunpack.c.l.b16 %v104
    %v388 = vunpack.c.h.b16 %v104
    %v389 = vunpack.c.l.b16 %v105
    %v390 = vunpack.c.h.b16 %v105
    %v391 = vunpack.c.l.b16 %v106
    %v392 = vunpack.c.h.b16 %v106
    %v393 = vunpack.c.l.b16 %v107
    %v394 = vunpack.c.h.b16 %v107
    %v395 = vunpack.c.l.b16 %v108
    %v396 = vunpack.c.h.b16 %v108
    %v397 = vunpack.c.l.b16 %v109
    %v398 = vunpack.c.h.b16 %v109
    %v399 = vunpack.c.l.b16 %v110
    %v400 = vunpack.c.h.b16 %v110
    %v401 = vunpack.c.l.b16 %v111
    %v402 = vunpack.c.h.b16 %v111
    %v403 = vunpack.c.l.b16 %v112
    %v404 = vunpack.c.h.b16 %v112
    %v405 = vunpack.c.l.b16 %v113
    %v406 = vunpack.c.h.b16 %v113
    %v407 = vunpack.c.l.b16 %v114
    %v408 = vunpack.c.h.b16 %v114
    %v409 = vunpack.c.l.b16 %v115
    %v410 = vunpack.c.h.b16 %v115
    %v411 = vunpack.c.l.b16 %v116
    %v412 = vunpack.c.h.b16 %v116
    %v413 = vunpack.c.l.b16 %v117
    %v414 = vunpack.c.h.b16 %v117
    %v415 = vunpack.c.l.b16 %v118
    %v416 = vunpack.c.h.b16 %v118
    %v417 = vunpack.c.l.b16 %v119
    %v418 = vunpack.c.h.b16 %v119
    %v419 = vunpack.c.l.b16 %v120
    %v420 = vunpack.c.h.b16 %v120
    %v421 = vunpack.c.l.b16 %v121
    %v422 = vunpack.c.h.b16 %v121
    %v423 = vunpack.c.l.b16 %v122
    %v424 = vunpack.c.h.b16 %v122
    %v425 = vunpack.c.l.b16 %v123
    %v426 = vunpack.c.h.b16 %v123
    %v427 = vunpack.c.l.b16 %v124
    %v428 = vunpack.c.h.b16 %v124
    %v429 = vunpack.c.l.b16 %v125
    %v430 = vunpack.c.h.b16 %v125
    %v431 = vunpack.c.l.b16 %v126
    %v432 = vunpack.c.h.b16 %v126
    %v433 = vunpack.c.l.b16 %v127
    %v434 = vunpack.c.h.b16 %v127
    %v435 = vunpack.c.l.b16 %v128
    %v436 = vunpack.c.h.b16 %v128
    %v437 = vunpack.c.l.b16 %v129
    %v438 = vunpack.c.h.b16 %v129
    %v439 = vunpack.c.l.b16 %v130
    %v440 = vunpack.c.h.b16 %v130
    %v441 = vunpack.c.l.b16 %v131
    %v442 = vunpack.c.h.b16 %v131
    %v443 = vunpack.c.l.b16 %v132
    %v444 = vunpack.c.h.b16 %v132
    %v445 = vunpack.c.l.b16 %v133
    %v446 = vunpack.c.h.b16 %v133
    %v447 = vunpack.c.l.b16 %v134
    %v448 = vunpack.c.h.b16 %v134
    %v449 = vunpack.c.l.b16 %v135
    %v450 = vunpack.c.h.b16 %v135
    %v451 = vunpack.c.l.b16 %v136
    %v452 = vunpack.c.h.b16 %v136
    %v453 = vunpack.c.l.b16 %v137
    %v454 = vunpack.c.h.b16 %v137
    %v455 = vunpack.c.l.b16 %v138
    %v456 = vunpack.c.h.b16 %v138
    %v457 = vunpack.c.l.b16 %v139
    %v458 = vunpack.c.h.b16 %v139
    %v459 = vunpack.c.l.b16 %v140
    %v460 = vunpack.c.h.b16 %v140
    %v461 = vunpack.c.l.b16 %v141
    %v462 = vunpack.c.h.b16 %v141
    %v463 = vunpack.c.l.b16 %v142
    %v464 = vunpack.c.h.b16 %v142
    %v465 = vunpack.c.l.b16 %v143
    %v466 = vunpack.c.h.b16 %v143
    %v467 = vunpack.c.l.b16 %v144
    %v468 = vunpack.c.h.b16 %v144
    %v469 = vunpack.c.l.b16 %v145
    %v470 = vunpack.c.h.b16 %v145
    %v471 = vunpack.c.l.b16 %v146
    %v472 = vunpack.c.h.b16 %v146
    %v473 = vunpack.c.l.b16 %v147
    %v474 = vunpack.c.h.b16 %v147
    %v475 = vunpack.c.l.b16 %v148
    %v476 = vunpack.c.h.b16 %v148
    %v477 = vunpack.c.l.b16 %v149
    %v478 = vunpack.c.h.b16 %v149
    %v479 = vunpack.c.l.b16 %v150
    %v480 = vunpack.c.h.b16 %v150
    %v481 = vpack.c.b16 %v291, %v289
    %v482 = vpack.c.b16 %v292, %v290
    %v483 = vpack.c.b16 %v295, %v293
    %v484 = vpack.c.b16 %v296, %v294
    %v485 = vpack.c.b16 %v299, %v297
    %v486 = vpack.c.b16 %v300, %v298
    %v487 = vpack.c.b16 %v303, %v301
    %v488 = vpack.c.b16 %v304, %v302
    %v489 = vpack.c.b16 %v307, %v305
    %v490 = vpack.c.b16 %v308, %v306
    %v491 = vpack.c.b16 %v311, %v309
    %v492 = vpack.c.b16 %v312, %v310
    %v493 = vpack.c.b16 %v315, %v313
    %v494 = vpack.c.b16 %v316, %v314
    %v495 = vpack.c.b16 %v319, %v317
    %v496 = vpack.c.b16 %v320, %v318
    %v497 = vpack.c.b16 %v323, %v321
    %v498 = vpack.c.b16 %v324, %v322
    %v499 = vpack.c.b16 %v327, %v325
    %v500 = vpack.c.b16 %v328, %v326
    %v501 = vpack.c.b16 %v331, %v329
    %v502 = vpack.c.b16 %v332, %v330
    %v503 = vpack.c.b16 %v335, %v333
    %v504 = vpack.c.b16 %v336, %v334
    %v505 = vpack.c.b16 %v339, %v337
    %v506 = vpack.c.b16 %v340, %v338
    %v507 = vpack.c.b16 %v343, %v341
    %v508 = vpack.c.b16 %v344, %v342
    %v509 = vpack.c.b16 %v347, %v345
    %v510 = vpack.c.b16 %v348, %v346
    %v511 = vpack.c.b16 %v351, %v349
    %v512 = vpack.c.b16 %v352, %v350
    %v513 = vpack.c.b16 %v355, %v353
    %v514 = vpack.c.b16 %v356, %v354
    %v515 = vpack.c.b16 %v359, %v357
    %v516 = vpack.c.b16 %v360, %v358
    %v517 = vpack.c.b16 %v363, %v361
    %v518 = vpack.c.b16 %v364, %v362
    %v519 = vpack.c.b16 %v367, %v365
    %v520 = vpack.c.b16 %v368, %v366
    %v521 = vpack.c.b16 %v371, %v369
    %v522 = vpack.c.b16 %v372, %v370
    %v523 = vpack.c.b16 %v375, %v373
    %v524 = vpack.c.b16 %v376, %v374
    %v525 = vpack.c.b16 %v379, %v377
    %v526 = vpack.c.b16 %v380, %v378
    %v527 = vpack.c.b16 %v383, %v381
    %v528 = vpack.c.b16 %v384, %v382
    %v529 = vpack.c.b16 %v387, %v385
    %v530 = vpack.c.b16 %v388, %v386
    %v531 = vpack.c.b16 %v391, %v389
    %v532 = vpack.c.b16 %v392, %v390
    %v533 = vpack.c.b16 %v395, %v393
    %v534 = vpack.c.b16 %v396, %v394
    %v535 = vpack.c.b16 %v399, %v397
    %v536 = vpack.c.b16 %v400, %v398
    %v537 = vpack.c.b16 %v403, %v401
    %v538 = vpack.c.b16 %v404, %v402
    %v539 = vpack.c.b16 %v407, %v405
    %v540 = vpack.c.b16 %v408, %v406
    %v541 = vpack.c.b16 %v411, %v409
    %v542 = vpack.c.b16 %v412, %v410
    %v543 = vpack.c.b16 %v415, %v413
    %v544 = vpack.c.b16 %v416, %v414
    %v545 = vpack.c.b16 %v419, %v417
    %v546 = vpack.c.b16 %v420, %v418
    %v547 = vpack.c.b16 %v423, %v421
    %v548 = vpack.c.b16 %v424, %v422
    %v549 = vpack.c.b16 %v427, %v425
    %v550 = vpack.c.b16 %v428, %v426
    %v551 = vpack.c.b16 %v431, %v429
    %v552 = vpack.c.b16 %v432, %v430
    %v553 = vpack.c.b16 %v435, %v433
    %v554 = vpack.c.b16 %v436, %v434
    %v555 = vpack.c.b16 %v439, %v437
    %v556 = vpack.c.b16 %v440, %v438
    %v557 = vpack.c.b16 %v443, %v441
    %v558 = vpack.c.b16 %v444, %v442
    %v559 = vpack.c.b16 %v447, %v445
    %v560 = vpack.c.b16 %v448, %v446
    %v561 = vpack.c.b16 %v451, %v449
    %v562 = vpack.c.b16 %v452, %v450
    %v563 = vpack.c.b16 %v455, %v453
    %v564 = vpack.c.b16 %v456, %v454
    %v565 = vpack.c.b16 %v459, %v457
    %v566 = vpack.c.b16 %v460, %v458
    %v567 = vpack.c.b16 %v463, %v461
    %v568 = vpack.c.b16 %v464, %v462
    %v569 = vpack.c.b16 %v467, %v465
    %v570 = vpack.c.b16 %v468, %v466
    %v571 = vpack.c.b16 %v471, %v469
    %v572 = vpack.c.b16 %v472, %v470
    %v573 = vpack.c.b16 %v475, %v473
    %v574 = vpack.c.b16 %v476, %v474
    %v575 = vpack.c.b16 %v479, %v477
    %v576 = vpack.c.b16 %v480, %v478
    %673 = vmatprep.subr.bf16.mxu0 %v496
    %674 = vmatpush1.bf16.msra.mxu0 %v495
    %675 = vmatprep.subr.bf16.mxu0 %v494
    %676 = vmatpush1.bf16.msra.mxu0 %v493
    %677 = vmatprep.subr.bf16.mxu0 %v492
    %678 = vmatpush1.bf16.msra.mxu0 %v491
    %679 = vmatprep.subr.bf16.mxu0 %v490
    %680 = vmatpush1.bf16.msra.mxu0 %v489
    %681 = vmatprep.subr.bf16.mxu0 %v488
    %682 = vmatpush1.bf16.msra.mxu0 %v487
    %683 = vmatprep.subr.bf16.mxu0 %v486
    %684 = vmatpush1.bf16.msra.mxu0 %v485
    %685 = vmatprep.subr.bf16.mxu0 %v484
    %686 = vmatpush1.bf16.msra.mxu0 %v483
    %687 = vmatprep.subr.bf16.mxu0 %v482
    %688 = vmatpush1.bf16.msra.mxu0 %v481
    %689 = vmatprep.subr.bf16.mxu0 %v512
    %690 = vmatpush2.bf16.msra.mxu0 %v511
    %691 = vmatprep.subr.bf16.mxu0 %v510
    %692 = vmatpush2.bf16.msra.mxu0 %v509
    %693 = vmatprep.subr.bf16.mxu0 %v508
    %694 = vmatpush2.bf16.msra.mxu0 %v507
    %695 = vmatprep.subr.bf16.mxu0 %v506
    %696 = vmatpush2.bf16.msra.mxu0 %v505
    %697 = vmatprep.subr.bf16.mxu0 %v504
    %698 = vmatpush2.bf16.msra.mxu0 %v503
    %699 = vmatprep.subr.bf16.mxu0 %v502
    %700 = vmatpush2.bf16.msra.mxu0 %v501
    %701 = vmatprep.subr.bf16.mxu0 %v500
    %702 = vmatpush2.bf16.msra.mxu0 %v499
    %703 = vmatprep.subr.bf16.mxu0 %v498
    %704 = vmatpush2.bf16.msra.mxu0 %v497
    %705 = vmatprep.mubr.bf16.mxu0 %v182
    %706 = vmatmul.mubr.bf16.gmra.mxu0 %v181
    %v707 = vpop.f32.mrf.mxu0
    %v708 = vadd.f32 %v156, %v707
    %v709 = vpop.f32.mrf.mxu0
    %v710 = vadd.f32 %v160, %v709
    %v711 = vpop.f32.mrf.mxu0
    %v712 = vadd.f32 %v156, %v711
    %v713 = vpop.f32.mrf.mxu0
    %v714 = vadd.f32 %v160, %v713
    %715 = vdwg.mxu0
    %716 = vmatprep.subr.bf16.mxu0 %v528
    %717 = vmatpush1.bf16.msra.mxu0 %v527
    %718 = vmatprep.subr.bf16.mxu0 %v526
    %719 = vmatpush1.bf16.msra.mxu0 %v525
    %720 = vmatprep.subr.bf16.mxu0 %v524
    %721 = vmatpush1.bf16.msra.mxu0 %v523
    %722 = vmatprep.subr.bf16.mxu0 %v522
    %723 = vmatpush1.bf16.msra.mxu0 %v521
    %724 = vmatprep.subr.bf16.mxu0 %v520
    %725 = vmatpush1.bf16.msra.mxu0 %v519
    %726 = vmatprep.subr.bf16.mxu0 %v518
    %727 = vmatpush1.bf16.msra.mxu0 %v517
    %728 = vmatprep.subr.bf16.mxu0 %v516
    %729 = vmatpush1.bf16.msra.mxu0 %v515
    %730 = vmatprep.subr.bf16.mxu0 %v514
    %731 = vmatpush1.bf16.msra.mxu0 %v513
    %732 = vmatprep.subr.bf16.mxu0 %v544
    %733 = vmatpush2.bf16.msra.mxu0 %v543
    %734 = vmatprep.subr.bf16.mxu0 %v542
    %735 = vmatpush2.bf16.msra.mxu0 %v541
    %736 = vmatprep.subr.bf16.mxu0 %v540
    %737 = vmatpush2.bf16.msra.mxu0 %v539
    %738 = vmatprep.subr.bf16.mxu0 %v538
    %739 = vmatpush2.bf16.msra.mxu0 %v537
    %740 = vmatprep.subr.bf16.mxu0 %v536
    %741 = vmatpush2.bf16.msra.mxu0 %v535
    %742 = vmatprep.subr.bf16.mxu0 %v534
    %743 = vmatpush2.bf16.msra.mxu0 %v533
    %744 = vmatprep.subr.bf16.mxu0 %v532
    %745 = vmatpush2.bf16.msra.mxu0 %v531
    %746 = vmatprep.subr.bf16.mxu0 %v530
    %747 = vmatpush2.bf16.msra.mxu0 %v529
    %748 = vmatprep.mubr.bf16.mxu0 %v184
    %749 = vmatmul.mubr.bf16.gmra.mxu0 %v183
    %v750 = vpop.f32.mrf.mxu0
    %v751 = vadd.f32 %v708, %v750
    %v752 = vpop.f32.mrf.mxu0
    %v753 = vadd.f32 %v710, %v752
    %v754 = vpop.f32.mrf.mxu0
    %v755 = vadd.f32 %v712, %v754
    %v756 = vpop.f32.mrf.mxu0
    %v757 = vadd.f32 %v714, %v756
    %758 = vdwg.mxu0
    %759 = vmatprep.subr.bf16.mxu0 %v560
    %760 = vmatpush1.bf16.msra.mxu0 %v559
    %761 = vmatprep.subr.bf16.mxu0 %v558
    %762 = vmatpush1.bf16.msra.mxu0 %v557
    %763 = vmatprep.subr.bf16.mxu0 %v556
    %764 = vmatpush1.bf16.msra.mxu0 %v555
    %765 = vmatprep.subr.bf16.mxu0 %v554
    %766 = vmatpush1.bf16.msra.mxu0 %v553
    %767 = vmatprep.subr.bf16.mxu0 %v552
    %768 = vmatpush1.bf16.msra.mxu0 %v551
    %769 = vmatprep.subr.bf16.mxu0 %v550
    %770 = vmatpush1.bf16.msra.mxu0 %v549
    %771 = vmatprep.subr.bf16.mxu0 %v548
    %772 = vmatpush1.bf16.msra.mxu0 %v547
    %773 = vmatprep.subr.bf16.mxu0 %v546
    %774 = vmatpush1.bf16.msra.mxu0 %v545
    %775 = vmatprep.subr.bf16.mxu0 %v576
    %776 = vmatpush2.bf16.msra.mxu0 %v575
    %777 = vmatprep.subr.bf16.mxu0 %v574
    %778 = vmatpush2.bf16.msra.mxu0 %v573
    %779 = vmatprep.subr.bf16.mxu0 %v572
    %780 = vmatpush2.bf16.msra.mxu0 %v571
    %781 = vmatprep.subr.bf16.mxu0 %v570
    %782 = vmatpush2.bf16.msra.mxu0 %v569
    %783 = vmatprep.subr.bf16.mxu0 %v568
    %784 = vmatpush2.bf16.msra.mxu0 %v567
    %785 = vmatprep.subr.bf16.mxu0 %v566
    %786 = vmatpush2.bf16.msra.mxu0 %v565
    %787 = vmatprep.subr.bf16.mxu0 %v564
    %788 = vmatpush2.bf16.msra.mxu0 %v563
    %789 = vmatprep.subr.bf16.mxu0 %v562
    %790 = vmatpush2.bf16.msra.mxu0 %v561
    %791 = vmatprep.mubr.bf16.mxu0 %v186
    %792 = vmatmul.mubr.bf16.gmra.mxu0 %v185
    %v793 = vpop.f32.mrf.mxu0
    %v794 = vadd.f32 %v751, %v793
    %v795 = vpop.f32.mrf.mxu0
    %v796 = vadd.f32 %v753, %v795
    %v797 = vpop.f32.mrf.mxu0
    %v798 = vadd.f32 %v755, %v797
    %v799 = vpop.f32.mrf.mxu0
    %v800 = vadd.f32 %v757, %v799
    %801 = vdwg.mxu0
    %v802 = vxor.u32 %v794, 2147483648
    %v803 = vxor.u32 %v796, 2147483648
    %v804 = vxor.u32 %v798, 2147483648
    %v805 = vxor.u32 %v800, 2147483648
    %v806 = vmul.f32 %v802, 1.442695
    %v807 = vpow.pop %v806
    %v808 = vmul.f32 %v803, 1.442695
    %v809 = vpow.pop %v808
    %v810 = vmul.f32 %v804, 1.442695
    %v811 = vpow.pop %v810
    %v812 = vmul.f32 %v805, 1.442695
    %v813 = vpow.pop %v812
    %v814 = vadd.f32 %v807, 1.0
    %v815 = vadd.f32 %v809, 1.0
    %v816 = vadd.f32 %v811, 1.0
    %v817 = vadd.f32 %v813, 1.0
    %v818 = vrcp.pop %v814
    %v819 = vmul.f32 1.0, %v818
    %v820 = vrcp.pop %v815
    %v821 = vmul.f32 1.0, %v820
    %v822 = vrcp.pop %v816
    %v823 = vmul.f32 1.0, %v822
    %v824 = vrcp.pop %v817
    %v825 = vmul.f32 1.0, %v824
    %v826 = vpack.c.bf16 %v823, %v819
    %v827 = vpack.c.bf16 %v825, %v821
    %v828 = vld [vmem:[#allocation4] sm:$0xff]
    %v829 = vld [vmem:[#allocation4 + $0x8] sm:$0xf]
    %v830 = vld [vmem:[#allocation4 + $0xc] sm:$0xff]
    %v831 = vld [vmem:[#allocation4 + $0x14] sm:$0xf]
    %v832 = vld [vmem:[#allocation4 + $0x18] sm:$0xff]
    %v833 = vld [vmem:[#allocation4 + $0x20] sm:$0xf]
    %v834 = vld [vmem:[#allocation4 + $0x24] sm:$0xff]
    %v835 = vld [vmem:[#allocation4 + $0x2c] sm:$0xf]
    %v836 = vld [vmem:[#allocation4 + $0x30] sm:$0xff]
    %v837 = vld [vmem:[#allocation4 + $0x38] sm:$0xf]
    %v838 = vld [vmem:[#allocation4 + $0x3c] sm:$0xff]
    %v839 = vld [vmem:[#allocation4 + $0x44] sm:$0xf]
    %v840 = vld [vmem:[#allocation4 + $0x48] sm:$0xff]
    %v841 = vld [vmem:[#allocation4 + $0x50] sm:$0xf]
    %v842 = vld [vmem:[#allocation4 + $0x54] sm:$0xff]
    %v843 = vld [vmem:[#allocation4 + $0x5c] sm:$0xf]
    %v844 = vld [vmem:[#allocation4 + $0x60] sm:$0xff]
    %v845 = vld [vmem:[#allocation4 + $0x68] sm:$0xf]
    %v846 = vld [vmem:[#allocation4 + $0x6c] sm:$0xff]
    %v847 = vld [vmem:[#allocation4 + $0x74] sm:$0xf]
    %v848 = vld [vmem:[#allocation4 + $0x78] sm:$0xff]
    %v849 = vld [vmem:[#allocation4 + $0x80] sm:$0xf]
    %v850 = vld [vmem:[#allocation4 + $0x84] sm:$0xff]
    %v851 = vld [vmem:[#allocation4 + $0x8c] sm:$0xf]
    %v852 = vld [vmem:[#allocation4 + $0x90] sm:$0xff]
    %v853 = vld [vmem:[#allocation4 + $0x98] sm:$0xf]
    %v854 = vld [vmem:[#allocation4 + $0x9c] sm:$0xff]
    %v855 = vld [vmem:[#allocation4 + $0xa4] sm:$0xf]
    %v856 = vld [vmem:[#allocation4 + $0xa8] sm:$0xff]
    %v857 = vld [vmem:[#allocation4 + $0xb0] sm:$0xf]
    %v858 = vld [vmem:[#allocation4 + $0xb4] sm:$0xff]
    %v859 = vld [vmem:[#allocation4 + $0xbc] sm:$0xf]
    %v860 = vld [vmem:[#allocation4 + $0xc0] sm:$0xff]
    %v861 = vld [vmem:[#allocation4 + $0xc8] sm:$0xf]
    %v862 = vld [vmem:[#allocation4 + $0xcc] sm:$0xff]
    %v863 = vld [vmem:[#allocation4 + $0xd4] sm:$0xf]
    %v864 = vld [vmem:[#allocation4 + $0xd8] sm:$0xff]
    %v865 = vld [vmem:[#allocation4 + $0xe0] sm:$0xf]
    %v866 = vld [vmem:[#allocation4 + $0xe4] sm:$0xff]
    %v867 = vld [vmem:[#allocation4 + $0xec] sm:$0xf]
    %v868 = vld [vmem:[#allocation4 + $0xf0] sm:$0xff]
    %v869 = vld [vmem:[#allocation4 + $0xf8] sm:$0xf]
    %v870 = vld [vmem:[#allocation4 + $0xfc] sm:$0xff]
    %v871 = vld [vmem:[#allocation4 + $0x104] sm:$0xf]
    %v872 = vld [vmem:[#allocation4 + $0x108] sm:$0xff]
    %v873 = vld [vmem:[#allocation4 + $0x110] sm:$0xf]
    %v874 = vld [vmem:[#allocation4 + $0x114] sm:$0xff]
    %v875 = vld [vmem:[#allocation4 + $0x11c] sm:$0xf]
    %v876 = vld [vmem:[#allocation4 + $0x120] sm:$0xff]
    %v877 = vld [vmem:[#allocation4 + $0x128] sm:$0xf]
    %v878 = vld [vmem:[#allocation4 + $0x12c] sm:$0xff]
    %v879 = vld [vmem:[#allocation4 + $0x134] sm:$0xf]
    %v880 = vld [vmem:[#allocation4 + $0x138] sm:$0xff]
    %v881 = vld [vmem:[#allocation4 + $0x140] sm:$0xf]
    %v882 = vld [vmem:[#allocation4 + $0x144] sm:$0xff]
    %v883 = vld [vmem:[#allocation4 + $0x14c] sm:$0xf]
    %v884 = vld [vmem:[#allocation4 + $0x150] sm:$0xff]
    %v885 = vld [vmem:[#allocation4 + $0x158] sm:$0xf]
    %v886 = vld [vmem:[#allocation4 + $0x15c] sm:$0xff]
    %v887 = vld [vmem:[#allocation4 + $0x164] sm:$0xf]
    %v888 = vld [vmem:[#allocation4 + $0x168] sm:$0xff]
    %v889 = vld [vmem:[#allocation4 + $0x170] sm:$0xf]
    %v890 = vld [vmem:[#allocation4 + $0x174] sm:$0xff]
    %v891 = vld [vmem:[#allocation4 + $0x17c] sm:$0xf]
    %v892 = vld [vmem:[%s4] sm:$0x7]
    %v894 = vlaneseq
    %v895 = vshrl.u32 %v894, 7
    %v896 = vsub.s32 0, %v895
    %v897 = vrot.slane %v892, %v896
    %v898 = vlaneseq
    %v899 = vshrl.u32 %v898, 7
    %v900 = vsub.s32 1, %v899
    %v901 = vrot.slane %v892, %v900
    %v902 = vlaneseq
    %v903 = vshrl.u32 %v902, 7
    %v904 = vsub.s32 2, %v903
    %v905 = vrot.slane %v892, %v904
    %v973 = vunpack.c.l.b16 %v828
    %v974 = vunpack.c.h.b16 %v828
    %v975 = vunpack.c.l.b16 %v829
    %v976 = vunpack.c.l.b16 %v830
    %v977 = vunpack.c.h.b16 %v830
    %v978 = vunpack.c.l.b16 %v831
    %v979 = vunpack.c.l.b16 %v832
    %v980 = vunpack.c.h.b16 %v832
    %v981 = vunpack.c.l.b16 %v833
    %v982 = vunpack.c.l.b16 %v834
    %v983 = vunpack.c.h.b16 %v834
    %v984 = vunpack.c.l.b16 %v835
    %v985 = vunpack.c.l.b16 %v836
    %v986 = vunpack.c.h.b16 %v836
    %v987 = vunpack.c.l.b16 %v837
    %v988 = vunpack.c.l.b16 %v838
    %v989 = vunpack.c.h.b16 %v838
    %v990 = vunpack.c.l.b16 %v839
    %v991 = vunpack.c.l.b16 %v840
    %v992 = vunpack.c.h.b16 %v840
    %v993 = vunpack.c.l.b16 %v841
    %v994 = vunpack.c.l.b16 %v842
    %v995 = vunpack.c.h.b16 %v842
    %v996 = vunpack.c.l.b16 %v843
    %v997 = vunpack.c.l.b16 %v844
    %v998 = vunpack.c.h.b16 %v844
    %v999 = vunpack.c.l.b16 %v845
    %v1000 = vunpack.c.l.b16 %v846
    %v1001 = vunpack.c.h.b16 %v846
    %v1002 = vunpack.c.l.b16 %v847
    %v1003 = vunpack.c.l.b16 %v848
    %v1004 = vunpack.c.h.b16 %v848
    %v1005 = vunpack.c.l.b16 %v849
    %v1006 = vunpack.c.l.b16 %v850
    %v1007 = vunpack.c.h.b16 %v850
    %v1008 = vunpack.c.l.b16 %v851
    %v1009 = vunpack.c.l.b16 %v852
    %v1010 = vunpack.c.h.b16 %v852
    %v1011 = vunpack.c.l.b16 %v853
    %v1012 = vunpack.c.l.b16 %v854
    %v1013 = vunpack.c.h.b16 %v854
    %v1014 = vunpack.c.l.b16 %v855
    %v1015 = vunpack.c.l.b16 %v856
    %v1016 = vunpack.c.h.b16 %v856
    %v1017 = vunpack.c.l.b16 %v857
    %v1018 = vunpack.c.l.b16 %v858
    %v1019 = vunpack.c.h.b16 %v858
    %v1020 = vunpack.c.l.b16 %v859
    %v1021 = vunpack.c.l.b16 %v860
    %v1022 = vunpack.c.h.b16 %v860
    %v1023 = vunpack.c.l.b16 %v861
    %v1024 = vunpack.c.l.b16 %v862
    %v1025 = vunpack.c.h.b16 %v862
    %v1026 = vunpack.c.l.b16 %v863
    %v1027 = vunpack.c.l.b16 %v864
    %v1028 = vunpack.c.h.b16 %v864
    %v1029 = vunpack.c.l.b16 %v865
    %v1030 = vunpack.c.l.b16 %v866
    %v1031 = vunpack.c.h.b16 %v866
    %v1032 = vunpack.c.l.b16 %v867
    %v1033 = vunpack.c.l.b16 %v868
    %v1034 = vunpack.c.h.b16 %v868
    %v1035 = vunpack.c.l.b16 %v869
    %v1036 = vunpack.c.l.b16 %v870
    %v1037 = vunpack.c.h.b16 %v870
    %v1038 = vunpack.c.l.b16 %v871
    %v1039 = vunpack.c.l.b16 %v872
    %v1040 = vunpack.c.h.b16 %v872
    %v1041 = vunpack.c.l.b16 %v873
    %v1042 = vunpack.c.l.b16 %v874
    %v1043 = vunpack.c.h.b16 %v874
    %v1044 = vunpack.c.l.b16 %v875
    %v1045 = vunpack.c.l.b16 %v876
    %v1046 = vunpack.c.h.b16 %v876
    %v1047 = vunpack.c.l.b16 %v877
    %v1048 = vunpack.c.l.b16 %v878
    %v1049 = vunpack.c.h.b16 %v878
    %v1050 = vunpack.c.l.b16 %v879
    %v1051 = vunpack.c.l.b16 %v880
    %v1052 = vunpack.c.h.b16 %v880
    %v1053 = vunpack.c.l.b16 %v881
    %v1054 = vunpack.c.l.b16 %v882
    %v1055 = vunpack.c.h.b16 %v882
    %v1056 = vunpack.c.l.b16 %v883
    %v1057 = vunpack.c.l.b16 %v884
    %v1058 = vunpack.c.h.b16 %v884
    %v1059 = vunpack.c.l.b16 %v885
    %v1060 = vunpack.c.l.b16 %v886
    %v1061 = vunpack.c.h.b16 %v886
    %v1062 = vunpack.c.l.b16 %v887
    %v1063 = vunpack.c.l.b16 %v888
    %v1064 = vunpack.c.h.b16 %v888
    %v1065 = vunpack.c.l.b16 %v889
    %v1066 = vunpack.c.l.b16 %v890
    %v1067 = vunpack.c.h.b16 %v890
    %v1068 = vunpack.c.l.b16 %v891
    %v1069 = vpack.c.b16 %v976, %v973
    %v1070 = vpack.c.b16 %v977, %v974
    %v1071 = vpack.c.b16 %v978, %v975
    %v1072 = vpack.c.b16 %v982, %v979
    %v1073 = vpack.c.b16 %v983, %v980
    %v1074 = vpack.c.b16 %v984, %v981
    %v1075 = vpack.c.b16 %v988, %v985
    %v1076 = vpack.c.b16 %v989, %v986
    %v1077 = vpack.c.b16 %v990, %v987
    %v1078 = vpack.c.b16 %v994, %v991
    %v1079 = vpack.c.b16 %v995, %v992
    %v1080 = vpack.c.b16 %v996, %v993
    %v1081 = vpack.c.b16 %v1000, %v997
    %v1082 = vpack.c.b16 %v1001, %v998
    %v1083 = vpack.c.b16 %v1002, %v999
    %v1084 = vpack.c.b16 %v1006, %v1003
    %v1085 = vpack.c.b16 %v1007, %v1004
    %v1086 = vpack.c.b16 %v1008, %v1005
    %v1087 = vpack.c.b16 %v1012, %v1009
    %v1088 = vpack.c.b16 %v1013, %v1010
    %v1089 = vpack.c.b16 %v1014, %v1011
    %v1090 = vpack.c.b16 %v1018, %v1015
    %v1091 = vpack.c.b16 %v1019, %v1016
    %v1092 = vpack.c.b16 %v1020, %v1017
    %v1093 = vpack.c.b16 %v1024, %v1021
    %v1094 = vpack.c.b16 %v1025, %v1022
    %v1095 = vpack.c.b16 %v1026, %v1023
    %v1096 = vpack.c.b16 %v1030, %v1027
    %v1097 = vpack.c.b16 %v1031, %v1028
    %v1098 = vpack.c.b16 %v1032, %v1029
    %v1099 = vpack.c.b16 %v1036, %v1033
    %v1100 = vpack.c.b16 %v1037, %v1034
    %v1101 = vpack.c.b16 %v1038, %v1035
    %v1102 = vpack.c.b16 %v1042, %v1039
    %v1103 = vpack.c.b16 %v1043, %v1040
    %v1104 = vpack.c.b16 %v1044, %v1041
    %v1105 = vpack.c.b16 %v1048, %v1045
    %v1106 = vpack.c.b16 %v1049, %v1046
    %v1107 = vpack.c.b16 %v1050, %v1047
    %v1108 = vpack.c.b16 %v1054, %v1051
    %v1109 = vpack.c.b16 %v1055, %v1052
    %v1110 = vpack.c.b16 %v1056, %v1053
    %v1111 = vpack.c.b16 %v1060, %v1057
    %v1112 = vpack.c.b16 %v1061, %v1058
    %v1113 = vpack.c.b16 %v1062, %v1059
    %v1114 = vpack.c.b16 %v1066, %v1063
    %v1115 = vpack.c.b16 %v1067, %v1064
    %v1116 = vpack.c.b16 %v1068, %v1065
    %1165 = vmatprep.subr.bf16.mxu0 %v1091
    %1166 = vmatpush1.bf16.msra.mxu0 %v1090
    %1167 = vmatprep.subr.bf16.mxu0 %v1088
    %1168 = vmatpush1.bf16.msra.mxu0 %v1087
    %1169 = vmatprep.subr.bf16.mxu0 %v1085
    %1170 = vmatpush1.bf16.msra.mxu0 %v1084
    %1171 = vmatprep.subr.bf16.mxu0 %v1082
    %1172 = vmatpush1.bf16.msra.mxu0 %v1081
    %1173 = vmatprep.subr.bf16.mxu0 %v1079
    %1174 = vmatpush1.bf16.msra.mxu0 %v1078
    %1175 = vmatprep.subr.bf16.mxu0 %v1076
    %1176 = vmatpush1.bf16.msra.mxu0 %v1075
    %1177 = vmatprep.subr.bf16.mxu0 %v1073
    %1178 = vmatpush1.bf16.msra.mxu0 %v1072
    %1179 = vmatprep.subr.bf16.mxu0 %v1070
    %1180 = vmatpush1.bf16.msra.mxu0 %v1069
    %1181 = vmatprep.subr.bf16.mxu0 %v1115
    %1182 = vmatpush2.bf16.msra.mxu0 %v1114
    %1183 = vmatprep.subr.bf16.mxu0 %v1112
    %1184 = vmatpush2.bf16.msra.mxu0 %v1111
    %1185 = vmatprep.subr.bf16.mxu0 %v1109
    %1186 = vmatpush2.bf16.msra.mxu0 %v1108
    %1187 = vmatprep.subr.bf16.mxu0 %v1106
    %1188 = vmatpush2.bf16.msra.mxu0 %v1105
    %1189 = vmatprep.subr.bf16.mxu0 %v1103
    %1190 = vmatpush2.bf16.msra.mxu0 %v1102
    %1191 = vmatprep.subr.bf16.mxu0 %v1100
    %1192 = vmatpush2.bf16.msra.mxu0 %v1099
    %1193 = vmatprep.subr.bf16.mxu0 %v1097
    %1194 = vmatpush2.bf16.msra.mxu0 %v1096
    %1195 = vmatprep.subr.bf16.mxu0 %v1094
    %1196 = vmatpush2.bf16.msra.mxu0 %v1093
    %1197 = vmatprep.mubr.bf16.mxu0 %v827
    %1198 = vmatmul.mubr.bf16.gmra.mxu0 %v826
    %v1199 = vpop.f32.mrf.mxu0
    %v1200 = vadd.f32 %v897, %v1199
    %v1201 = vpop.f32.mrf.mxu0
    %v1202 = vadd.f32 %v901, %v1201
    %v1203 = vpop.f32.mrf.mxu0
    %v1204 = vadd.f32 %v897, %v1203
    %v1205 = vpop.f32.mrf.mxu0
    %v1206 = vadd.f32 %v901, %v1205
    %1207 = vdwg.mxu0
    %1208 = vmatprep.subr.bf16.mxu0 0
    %1209 = vmatpush1.bf16.msra.mxu0 %v1092
    %1210 = vmatprep.subr.bf16.mxu0 0
    %1211 = vmatpush1.bf16.msra.mxu0 %v1089
    %1212 = vmatprep.subr.bf16.mxu0 0
    %1213 = vmatpush1.bf16.msra.mxu0 %v1086
    %1214 = vmatprep.subr.bf16.mxu0 0
    %1215 = vmatpush1.bf16.msra.mxu0 %v1083
    %1216 = vmatprep.subr.bf16.mxu0 0
    %1217 = vmatpush1.bf16.msra.mxu0 %v1080
    %1218 = vmatprep.subr.bf16.mxu0 0
    %1219 = vmatpush1.bf16.msra.mxu0 %v1077
    %1220 = vmatprep.subr.bf16.mxu0 0
    %1221 = vmatpush1.bf16.msra.mxu0 %v1074
    %1222 = vmatprep.subr.bf16.mxu0 0
    %1223 = vmatpush1.bf16.msra.mxu0 %v1071
    %1224 = vmatprep.subr.bf16.mxu0 0
    %1225 = vmatpush2.bf16.msra.mxu0 %v1116
    %1226 = vmatprep.subr.bf16.mxu0 0
    %1227 = vmatpush2.bf16.msra.mxu0 %v1113
    %1228 = vmatprep.subr.bf16.mxu0 0
    %1229 = vmatpush2.bf16.msra.mxu0 %v1110
    %1230 = vmatprep.subr.bf16.mxu0 0
    %1231 = vmatpush2.bf16.msra.mxu0 %v1107
    %1232 = vmatprep.subr.bf16.mxu0 0
    %1233 = vmatpush2.bf16.msra.mxu0 %v1104
    %1234 = vmatprep.subr.bf16.mxu0 0
    %1235 = vmatpush2.bf16.msra.mxu0 %v1101
    %1236 = vmatprep.subr.bf16.mxu0 0
    %1237 = vmatpush2.bf16.msra.mxu0 %v1098
    %1238 = vmatprep.subr.bf16.mxu0 0
    %1239 = vmatpush2.bf16.msra.mxu0 %v1095
    %1240 = vmatprep.mubr.bf16.mxu0 %v827
    %1241 = vmatmul.mubr.bf16.gmra.mxu0 %v826
    %v1242 = vpop.f32.mrf.mxu0
    %v1243 = vadd.f32 %v905, %v1242
    %v1244 = vpop.f32.mrf.mxu0
    %v1245 = vpop.f32.mrf.mxu0
    %v1246 = vadd.f32 %v905, %v1245
    %v1247 = vpop.f32.mrf.mxu0
    %1248 = vdwg.mxu0
    %1249 = vst [vmem:[%s5] sm:$0xff] %v1200
    %1250 = vst [vmem:[%s5 + $0x8] sm:$0xff] %v1202
    %1251 = vst [vmem:[%s5 + $0x10] sm:$0xff] %v1243
    %1252 = vst [vmem:[%s5 + $0x18] sm:$0xff] %v1204
    %1253 = vst [vmem:[%s5 + $0x20] sm:$0xff] %v1206
    %1254 = vst [vmem:[%s5 + $0x28] sm:$0xff] %v1246
    // Predicated region
    $region30: #{nn_forward.1} parent=1 // pred_check
      _
    $region31: #{nn_forward.1} parent=1 // pred_check_branch
      %1256 = sbr.rel (0) target = $region33
    $region32: #{nn_forward.1} parent=1 // pred_region
      _
    $region33: #{nn_forward.1} parent=1 // pred_fallthru
      _
    // Predicated region
    $region34: #{nn_forward.1} parent=1 // pred_check
      _
    $region35: #{nn_forward.1} parent=1 // pred_check_branch
      %1258 = sbr.rel (0) target = $region37
    $region36: #{nn_forward.1} parent=1 // pred_region
      _
    $region37: #{nn_forward.1} parent=1 // pred_fallthru
      _
    %1259 = vsyncpa [#allocation3], 1
    %1260 = vsyncpa [#allocation5], 1

</llo_original>
